<compile_context>
chip_gen: v7x
topology: tpu7x:2x2x1
jax: 0.10.0
libtpu: 0.0.40
codegen_flags: <defaults>
</compile_context>

<pallas_src>
import jax
import jax.numpy as jnp
from jax.experimental import pallas as pl
from jax.experimental.pallas import tpu as pltpu


_LANE = 512          # last-dim width: multiple of 128 -> lane-dense, unmasked stores
_MAX_BLOCK_ROWS = 512  # 512x512 f32 tile = 1 MiB per buffer (double-buffered by Pallas)


def _round_up(n: int, m: int) -> int:
    return ((n + m - 1) // m) * m


def _relugt_kernel(params_ref, x_ref, o_ref):
    """One grid step processes one (block_rows, _LANE) tile.

    params_ref: (3,) f32 in SMEM -> [slope, alpha_neg, alpha_pos]
    x_ref:      (block_rows, _LANE) VMEM
    o_ref:      (block_rows, _LANE) VMEM
    """
    slope = params_ref[0]
    alpha_neg = params_ref[1]
    alpha_pos = params_ref[2]

    x = x_ref[...]
    neg = (alpha_neg * slope) * x      # scalar product folded before the broadcast mul
    pos = alpha_pos * (x * x)          # only the "positive" branch is squared
    o_ref[...] = jnp.where(x < 0, neg, pos).astype(o_ref.dtype)


def relugt(x, slope, alpha_neg, alpha_pos):
    """Elementwise ReLUGT over an arbitrarily shaped array `x`."""
    orig_shape = x.shape
    n = x.size
    flat = x.reshape(-1)

    # Lane-dense 2D layout: (rows, _LANE), rows padded to a multiple of the
    # row-block so the grid divides evenly and every store is full-tile.
    rows = _round_up(pl.cdiv(n, _LANE), 8)
    block_rows = min(_MAX_BLOCK_ROWS, rows)
    rows = _round_up(rows, block_rows)
    padded = rows * _LANE
    if padded != n:
        flat = jnp.pad(flat, (0, padded - n))
    x2d = flat.reshape(rows, _LANE)

    params = jnp.stack([
        jnp.asarray(slope, jnp.float32),
        jnp.asarray(alpha_neg, jnp.float32),
        jnp.asarray(alpha_pos, jnp.float32),
    ])

    grid = (rows // block_rows,)
    out2d = pl.pallas_call(
        _relugt_kernel,
        out_shape=jax.ShapeDtypeStruct((rows, _LANE), x.dtype),
        grid_spec=pltpu.PrefetchScalarGridSpec(
            num_scalar_prefetch=0,
            grid=grid,
            in_specs=[
                pl.BlockSpec(memory_space=pltpu.MemorySpace.SMEM),   # params (3,)
                pl.BlockSpec((block_rows, _LANE), lambda i: (i, 0)),  # x tile
            ],
            out_specs=pl.BlockSpec((block_rows, _LANE), lambda i: (i, 0)),
        ),
        compiler_params=pltpu.CompilerParams(
            dimension_semantics=("parallel",)),   # lets v7x shard tiles over 2 TCs
    )(params, x2d)

    return out2d.reshape(-1)[:n].reshape(orig_shape)


def _reference(x, slope, alpha_neg, alpha_pos):
    """Pure-JAX mirror of the PyTorch relugt_forward."""
    return jnp.where(x < 0, alpha_neg * slope * x, alpha_pos * jnp.square(x))


if __name__ == "__main__":
    key = jax.random.PRNGKey(0)
    k0, k1 = jax.random.split(key)

    # Defaults from the PyTorch module's __init__.
    slope, alpha_neg, alpha_pos = 0.05, 2.5, 1.0

    # Small 4-D tensor (elementwise op, any shape works).
    x = jax.random.normal(k0, (2, 4, 16, 16), jnp.float32)
    out = jax.block_until_ready(relugt(x, slope, alpha_neg, alpha_pos))
    ref = _reference(x, jnp.float32(slope), jnp.float32(alpha_neg), jnp.float32(alpha_pos))
    assert out.shape == x.shape
    assert jnp.allclose(out, ref, atol=1e-6, rtol=1e-6), "mismatch vs reference (4D)"

    # Ragged size to exercise the pad/slice path.
    x2 = jax.random.normal(k1, (3, 7, 45), jnp.float32)
    out2 = jax.block_until_ready(relugt(x2, slope, alpha_neg, alpha_pos))
    ref2 = _reference(x2, jnp.float32(slope), jnp.float32(alpha_neg), jnp.float32(alpha_pos))
    assert out2.shape == x2.shape
    assert jnp.allclose(out2, ref2, atol=1e-6, rtol=1e-6), "mismatch vs reference (ragged)"

    print("KERNEL_OK")
</pallas_src>

<mosaic_0001>
module attributes {stable_mosaic.version = 11 : i64} {
  func.func @_relugt_kernel(%arg0: i32, %arg1: memref<3xf32, #tpu.memory_space<smem>>, %arg2: memref<8x512xf32, #tpu.memory_space<vmem>>, %arg3: memref<8x512xf32, #tpu.memory_space<vmem>>) attributes {dimension_semantics = [#tpu.dimension_semantics<parallel>], iteration_bounds = array<i64: 1>, scalar_prefetch = 0 : i64, scratch_operands = 0 : i64, tpu.core_type = #tpu.core_type<tc>, window_params = [{transform_indices = @transform_0, window_bounds = array<i64: 3>}, {transform_indices = @transform_1, window_bounds = array<i64: 8, 512>}, {transform_indices = @transform_2, window_bounds = array<i64: 8, 512>}]} {
    %c0 = arith.constant 0 : index
    %0 = memref.load %arg1[%c0] : memref<3xf32, #tpu.memory_space<smem>>
    %c1 = arith.constant 1 : index
    %1 = memref.load %arg1[%c1] : memref<3xf32, #tpu.memory_space<smem>>
    %c2 = arith.constant 2 : index
    %2 = memref.load %arg1[%c2] : memref<3xf32, #tpu.memory_space<smem>>
    %c0_0 = arith.constant 0 : index
    %c0_1 = arith.constant 0 : index
    %3 = vector.load %arg2[%c0_0, %c0_1] : memref<8x512xf32, #tpu.memory_space<vmem>>, vector<8x512xf32>
    %4 = arith.mulf %1, %0 : f32
    %5 = vector.broadcast %4 : f32 to vector<8x512xf32>
    %6 = arith.mulf %5, %3 : vector<8x512xf32>
    %7 = arith.mulf %3, %3 : vector<8x512xf32>
    %8 = vector.broadcast %2 : f32 to vector<8x512xf32>
    %9 = arith.mulf %8, %7 : vector<8x512xf32>
    %cst = arith.constant 0.000000e+00 : f32
    %10 = vector.broadcast %cst : f32 to vector<8x512xf32>
    %11 = arith.cmpf olt, %3, %10 : vector<8x512xf32>
    %12 = arith.select %11, %6, %9 : vector<8x512xi1>, vector<8x512xf32>
    %c0_2 = arith.constant 0 : index
    %c0_3 = arith.constant 0 : index
    %13 = vector.load %arg3[%c0_2, %c0_3] : memref<8x512xf32, #tpu.memory_space<vmem>>, vector<8x512xf32>
    tpu.vector_store %arg3[%c0_2, %c0_3], %12 {strides = array<i32>} : memref<8x512xf32, #tpu.memory_space<vmem>>, vector<8x512xf32>,
    return
  }
  func.func @transform_0(%arg0: i32) -> i32 {
    %c0_i32 = arith.constant 0 : i32
    %c0_i32_0 = arith.constant 0 : i32
    return %c0_i32 : i32
  }
  func.func @transform_1(%arg0: i32) -> (i32, i32) {
    %c0_i32 = arith.constant 0 : i32
    %c0_i32_0 = arith.constant 0 : i32
    return %arg0, %c0_i32 : i32, i32
  }
  func.func @transform_2(%arg0: i32) -> (i32, i32) {
    %c0_i32 = arith.constant 0 : i32
    %c0_i32_0 = arith.constant 0 : i32
    return %arg0, %c0_i32 : i32, i32
  }
}

</mosaic_0001>

<llo_original>
// kernel: tpu_custom_call.1
$region0: #{tpu_custom_call.1}
  #allocation0 [shape = 'u32[]', space=smem, size = 0x4, offset = 0x4, fixed_abs, tag = 'smem constant byte address 0x4 - core index']
  #allocation1 [shape = 'u32[144,128]{1,0:T(1,128)}', space=vmem, size = 0x12000, scoped, tag = 'internal scratch']
  %s0 = inlined_call_operand.hbm [shape: f32[3], index: 0, kind: input, shape index: {}]
  %s1 = inlined_call_operand.hbm [shape: f32[8,512], index: 1, kind: input, shape index: {}]
  %s2 = inlined_call_operand.hbm [shape: f32[8,512], index: 2, kind: output, shape index: {}]
  %s3 = sld [smem:[#allocation0]]
  $region26: #{tpu_custom_call.1} parent=0
    _
  %s5 = ssub.s32 1, %s3
  %s6 = scalar_select 0, %s5, %s3
  $region1: #{tpu_custom_call.1} parent=0
    #allocation2 [shape = 'u8[512]{0}', space=smem, size = 0x200, scoped, tag = 'input window, operand 0, single buffered']
    #allocation3 [shape = 's32[1]{0}', space=sflag, size = 0x4, scoped, tag = 'scoped memory for tpu_custom_call.1']
    #allocation4 [shape = 's32[1]{0}', space=sflag, size = 0x4, scoped, tag = 'scoped memory for tpu_custom_call.1']
    #allocation5 [shape = 's32[1]{0}', space=sflag, size = 0x4, scoped, tag = 'scoped memory for tpu_custom_call.1']
    #allocation6 [shape = 'u8[16384]{0}', space=vmem, size = 0x4000, scoped, tag = 'input window, operand 1, single buffered']
    #allocation7 [shape = 'u8[16384]{0}', space=vmem, size = 0x4000, scoped, tag = 'output window, operand 0, single buffered']
    %7 = vsyncpa [#allocation5], 0
    %8 = vsyncpa [#allocation3], 0
    %9 = vsyncpa [#allocation4], 0
    // Predicated region
    $region2: #{tpu_custom_call.1} parent=1 // pred_check
      _
    $region3: #{tpu_custom_call.1} parent=1 // pred_check_branch
      %11 = sbr.rel (0) target = $region5
    $region4: #{tpu_custom_call.1} parent=1 // pred_region
      %s13 = ssub.s32 16, 16
      %14 = vsyncadd [#allocation5], %s13
      %17 = dma.hbm_to_smem %s0, 16, [#allocation2], [#allocation5]
    $region5: #{tpu_custom_call.1} parent=1 // pred_fallthru
      _
    // Predicated region
    $region6: #{tpu_custom_call.1} parent=1 // pred_check
      _
    $region7: #{tpu_custom_call.1} parent=1 // pred_check_branch
      %19 = sbr.rel (0) target = $region9
    $region8: #{tpu_custom_call.1} parent=1 // pred_region
      %s21 = ssub.s32 512, 512
      %22 = vsyncadd [#allocation3], %s21
      %s24 = sshll.u32 [#allocation6], 4
      %s25 = int_to_ptr.vmem [resolvable:$true] %s24
      %27 = dma.hbm_to_vmem [thread:$0]  %s1, 512, %s25, [#allocation3]
    $region9: #{tpu_custom_call.1} parent=1 // pred_fallthru
      _
    // Predicated region
    $region10: #{tpu_custom_call.1} parent=1 // pred_check
      _
    $region11: #{tpu_custom_call.1} parent=1 // pred_check_branch
      %29 = sbr.rel (0) target = $region13
    $region12: #{tpu_custom_call.1} parent=1 // pred_region
      %30 = dma.done [#allocation5], 16
    $region13: #{tpu_custom_call.1} parent=1 // pred_fallthru
      _
    // Predicated region
    $region14: #{tpu_custom_call.1} parent=1 // pred_check
      _
    $region15: #{tpu_custom_call.1} parent=1 // pred_check_branch
      %32 = sbr.rel (0) target = $region17
    $region16: #{tpu_custom_call.1} parent=1 // pred_region
      %33 = dma.done [#allocation3], 512
    $region17: #{tpu_custom_call.1} parent=1 // pred_fallthru
      _
    %34 = sfence
    %s35 = sld [smem:[#allocation2]]
    %s36 = sld [smem:[#allocation2 + $0x1]]
    %s37 = sld [smem:[#allocation2 + $0x2]]
    %v38 = vld [vmem:[#allocation6] sm:$0xff]
    %v39 = vld [vmem:[#allocation6 + $0x8] sm:$0xff]
    %v40 = vld [vmem:[#allocation6 + $0x10] sm:$0xff]
    %v41 = vld [vmem:[#allocation6 + $0x18] sm:$0xff]
    %s42 = smul.f32 %s36, %s35
    %v43 = vstv %s42
    %v44 = vmul.f32 %v43, %v38
    %v45 = vmul.f32 %v43, %v39
    %v46 = vmul.f32 %v43, %v40
    %v47 = vmul.f32 %v43, %v41
    %v48 = vmul.f32 %v38, %v38
    %v49 = vmul.f32 %v39, %v39
    %v50 = vmul.f32 %v40, %v40
    %v51 = vmul.f32 %v41, %v41
    %v52 = vstv %s37
    %v53 = vmul.f32 %v52, %v48
    %v54 = vmul.f32 %v52, %v49
    %v55 = vmul.f32 %v52, %v50
    %v56 = vmul.f32 %v52, %v51
    %vm57 = vcmp.lt.f32.partialorder %v38, 0.0
    %vm58 = vcmp.lt.f32.partialorder %v39, 0.0
    %vm59 = vcmp.lt.f32.partialorder %v40, 0.0
    %vm60 = vcmp.lt.f32.partialorder %v41, 0.0
    %v61 = vsel %vm57, %v44, %v53
    %v62 = vsel %vm58, %v45, %v54
    %v63 = vsel %vm59, %v46, %v55
    %v64 = vsel %vm60, %v47, %v56
    %65 = vst [vmem:[#allocation7] sm:$0xff] %v61
    %66 = vst [vmem:[#allocation7 + $0x8] sm:$0xff] %v62
    %67 = vst [vmem:[#allocation7 + $0x10] sm:$0xff] %v63
    %68 = vst [vmem:[#allocation7 + $0x18] sm:$0xff] %v64
    // Predicated region
    $region18: #{tpu_custom_call.1} parent=1 // pred_check
      _
    $region19: #{tpu_custom_call.1} parent=1 // pred_check_branch
      %70 = sbr.rel (0) target = $region21
    $region20: #{tpu_custom_call.1} parent=1 // pred_region
      %s72 = ssub.s32 512, 512
      %73 = vsyncadd [#allocation4], %s72
      %s75 = sshll.u32 [#allocation7], 4
      %s76 = int_to_ptr.vmem [resolvable:$true] %s75
      %78 = dma.vmem_to_hbm [thread:$0]  %s76, 512, %s2, [#allocation4]
    $region21: #{tpu_custom_call.1} parent=1 // pred_fallthru
      _
    // Predicated region
    $region22: #{tpu_custom_call.1} parent=1 // pred_check
      _
    $region23: #{tpu_custom_call.1} parent=1 // pred_check_branch
      %80 = sbr.rel (0) target = $region25
    $region24: #{tpu_custom_call.1} parent=1 // pred_region
      %81 = dma.done [#allocation4], 512
    $region25: #{tpu_custom_call.1} parent=1 // pred_fallthru
      _
    %82 = vsyncpa [#allocation3], 1
    %83 = vsyncpa [#allocation4], 1
    %84 = vsyncpa [#allocation5], 1

</llo_original>
